<compile_context>
chip_gen: v6e
topology: v6e:2x2x1
jax: 0.10.0
libtpu: 0.0.40
codegen_flags: <defaults>
</compile_context>

<pallas_src>
import functools

import jax
import jax.numpy as jnp
from jax.experimental import pallas as pl
from jax.experimental.pallas import tpu as pltpu


def _snn_forward_kernel(x_ref, w1_ref, b1_ref, w2_ref, b2_ref, out_ref,
                        cur1_scr, spk1_scr, cur2_scr, *, T, B, beta, threshold):
    """x_ref: (T*B, F); out_ref: (T*B, F); scratch in VMEM."""
    # ---- (1) fc1 hoisted: one (T*B, F) @ (F, H) matmul + bias -> scratch ----
    cur1_scr[...] = (jnp.dot(x_ref[...], w1_ref[...],
                             preferred_element_type=jnp.float32)
                     + b1_ref[...])

    # ---- (2) LIF1 recurrence (pure VPU), stack spikes into scratch ---------
    H = w1_ref.shape[1]
    mem1 = jnp.zeros((B, H), jnp.float32)
    for t in range(T):  # T small & static; static, tile-aligned row slices
        base1 = beta * mem1 + cur1_scr[t * B:(t + 1) * B, :]
        mem1 = jnp.where(mem1 > threshold, base1 - threshold, base1)
        spk1_scr[t * B:(t + 1) * B, :] = (mem1 > threshold).astype(jnp.float32)

    # ---- (3) fc2 hoisted: ONE (T*B, H) @ (H, F) matmul + bias -> scratch ---
    cur2_scr[...] = (jnp.dot(spk1_scr[...], w2_ref[...],
                             preferred_element_type=jnp.float32)
                     + b2_ref[...])

    # ---- (4) LIF2 recurrence, write spikes straight to the output ----------
    F = x_ref.shape[1]
    mem2 = jnp.zeros((B, F), jnp.float32)
    for t in range(T):
        base2 = beta * mem2 + cur2_scr[t * B:(t + 1) * B, :]
        mem2 = jnp.where(mem2 > threshold, base2 - threshold, base2)
        out_ref[t * B:(t + 1) * B, :] = (mem2 > threshold).astype(jnp.float32)


def pattern_generator_forward(x, w1, b1, w2, b2, *, beta=0.5, threshold=0.1):
    """x: (T, B, num_input) float32. Returns (T, B, num_input) spikes."""
    T, B, F = x.shape
    H = w1.shape[1]
    assert w1.shape == (F, H) and w2.shape == (H, F)
    b1 = b1.reshape(1, H)
    b2 = b2.reshape(1, F)
    x2d = x.reshape(T * B, F)  # row-major (T,B,F)->(T*B,F): free, t-major rows

    kernel = functools.partial(_snn_forward_kernel, T=T, B=B,
                               beta=float(beta), threshold=float(threshold))

    out2d = pl.pallas_call(
        kernel,
        out_shape=jax.ShapeDtypeStruct((T * B, F), jnp.float32),
        grid=(1,),  # single invocation: whole recurrence inside the kernel
        in_specs=[
            pl.BlockSpec((T * B, F), lambda i: (0, 0)),  # x (full, 2-D)
            pl.BlockSpec((F, H), lambda i: (0, 0)),      # fc1 weight (in,out)
            pl.BlockSpec((1, H), lambda i: (0, 0)),      # fc1 bias
            pl.BlockSpec((H, F), lambda i: (0, 0)),      # fc2 weight (in,out)
            pl.BlockSpec((1, F), lambda i: (0, 0)),      # fc2 bias
        ],
        out_specs=pl.BlockSpec((T * B, F), lambda i: (0, 0)),
        scratch_shapes=[
            pltpu.VMEM((T * B, H), jnp.float32),  # cur1_all
            pltpu.VMEM((T * B, H), jnp.float32),  # spk1_all
            pltpu.VMEM((T * B, F), jnp.float32),  # cur2_all
        ],
        compiler_params=pltpu.CompilerParams(
            dimension_semantics=("arbitrary",),
        ),
    )(x2d, w1, b1, w2, b2)

    return out2d.reshape(T, B, F)


def reference_forward(x, w1, b1, w2, b2, *, beta=0.5, threshold=0.1):
    """Pure-JAX reference mirroring the PyTorch/snntorch forward."""
    T, B, F = x.shape
    H = w1.shape[1]

    def step(carry, x_t):
        mem1, mem2 = carry
        cur1 = x_t @ w1 + b1
        reset1 = (mem1 > threshold).astype(jnp.float32)
        mem1 = beta * mem1 + cur1 - reset1 * threshold
        spk1 = (mem1 > threshold).astype(jnp.float32)
        cur2 = spk1 @ w2 + b2
        reset2 = (mem2 > threshold).astype(jnp.float32)
        mem2 = beta * mem2 + cur2 - reset2 * threshold
        spk2 = (mem2 > threshold).astype(jnp.float32)
        return (mem1, mem2), spk2

    init = (jnp.zeros((B, H), jnp.float32), jnp.zeros((B, F), jnp.float32))
    _, out = jax.lax.scan(step, init, x)
    return out


if __name__ == "__main__":
    # Small, TPU-friendly shapes consistent with the module's forward:
    # x: (T=num_steps, B=batch, num_input), hidden = num_hidden.
    T, B, F, H = 8, 8, 128, 256
    beta, threshold = 0.5, 0.1

    key = jax.random.PRNGKey(0)
    kx, kw1, kb1, kw2, kb2 = jax.random.split(key, 5)

    # Deterministic PyTorch-Linear-style init: U(-1/sqrt(fan_in), 1/sqrt(fan_in)).
    def linear_init(kw, kb, fan_in, fan_out):
        bound = 1.0 / jnp.sqrt(fan_in)
        w = jax.random.uniform(kw, (fan_in, fan_out), jnp.float32, -bound, bound)
        b = jax.random.uniform(kb, (fan_out,), jnp.float32, -bound, bound)
        return w, b

    w1, b1 = linear_init(kw1, kb1, F, H)   # fc1: num_input -> num_hidden
    w2, b2 = linear_init(kw2, kb2, H, F)   # fc2: num_hidden -> num_input

    x = jax.random.normal(kx, (T, B, F), jnp.float32)

    out = pattern_generator_forward(x, w1, b1, w2, b2,
                                    beta=beta, threshold=threshold)
    out = jax.block_until_ready(out)

    ref = reference_forward(x, w1, b1, w2, b2, beta=beta, threshold=threshold)
    assert out.shape == (T, B, F)
    assert jnp.allclose(out, ref, atol=1e-5), "mismatch vs pure-JAX reference"

    print("KERNEL_OK")
</pallas_src>

<mosaic_0001>
module attributes {stable_mosaic.version = 11 : i64} {
  func.func @_snn_forward_kernel(%arg0: i32, %arg1: memref<64x128xf32, #tpu.memory_space<vmem>>, %arg2: memref<128x256xf32, #tpu.memory_space<vmem>>, %arg3: memref<1x256xf32, #tpu.memory_space<vmem>>, %arg4: memref<256x128xf32, #tpu.memory_space<vmem>>, %arg5: memref<1x128xf32, #tpu.memory_space<vmem>>, %arg6: memref<64x128xf32, #tpu.memory_space<vmem>>, %arg7: memref<64x256xf32, #tpu.memory_space<vmem>>, %arg8: memref<64x256xf32, #tpu.memory_space<vmem>>, %arg9: memref<64x128xf32, #tpu.memory_space<vmem>>) attributes {dimension_semantics = [#tpu.dimension_semantics<arbitrary>], iteration_bounds = array<i64: 1>, scalar_prefetch = 0 : i64, scratch_operands = 3 : i64, tpu.core_type = #tpu.core_type<tc>, window_params = [{pipeline_mode = #tpu.pipeline_mode<synchronous>, transform_indices = @transform_0, window_bounds = array<i64: 64, 128>}, {pipeline_mode = #tpu.pipeline_mode<synchronous>, transform_indices = @transform_1, window_bounds = array<i64: 128, 256>}, {pipeline_mode = #tpu.pipeline_mode<synchronous>, transform_indices = @transform_2, window_bounds = array<i64: 1, 256>}, {pipeline_mode = #tpu.pipeline_mode<synchronous>, transform_indices = @transform_3, window_bounds = array<i64: 256, 128>}, {pipeline_mode = #tpu.pipeline_mode<synchronous>, transform_indices = @transform_4, window_bounds = array<i64: 1, 128>}, {pipeline_mode = #tpu.pipeline_mode<synchronous>, transform_indices = @transform_5, window_bounds = array<i64: 64, 128>}]} {
    %c0 = arith.constant 0 : index
    %c0_0 = arith.constant 0 : index
    %0 = vector.load %arg1[%c0, %c0_0] : memref<64x128xf32, #tpu.memory_space<vmem>>, vector<64x128xf32>
    %c0_1 = arith.constant 0 : index
    %c0_2 = arith.constant 0 : index
    %1 = vector.load %arg2[%c0_1, %c0_2] : memref<128x256xf32, #tpu.memory_space<vmem>>, vector<128x256xf32>
    %cst = arith.constant dense<0.000000e+00> : vector<64x256xf32>
    %2 = tpu.matmul %0, %1, %cst {dimension_numbers = #tpu.dot_dimension_numbers<[1], [0], [0], [1], [0, 0, 1, 1], [], []>} : vector<64x128xf32>, vector<128x256xf32>, vector<64x256xf32> -> vector<64x256xf32>
    %c0_3 = arith.constant 0 : index
    %c0_4 = arith.constant 0 : index
    %3 = vector.load %arg3[%c0_3, %c0_4] : memref<1x256xf32, #tpu.memory_space<vmem>>, vector<1x256xf32>
    %4 = vector.broadcast %3 : vector<1x256xf32> to vector<64x256xf32>
    %5 = arith.addf %2, %4 : vector<64x256xf32>
    %c0_5 = arith.constant 0 : index
    %c0_6 = arith.constant 0 : index
    %6 = vector.load %arg7[%c0_5, %c0_6] : memref<64x256xf32, #tpu.memory_space<vmem>>, vector<64x256xf32>
    tpu.vector_store %arg7[%c0_5, %c0_6], %5 {strides = array<i32>} : memref<64x256xf32, #tpu.memory_space<vmem>>, vector<64x256xf32>,
    %cst_7 = arith.constant 0.000000e+00 : f32
    %7 = vector.broadcast %cst_7 : f32 to vector<8x256xf32>
    %cst_8 = arith.constant 5.000000e-01 : f32
    %8 = vector.broadcast %cst_8 : f32 to vector<8x256xf32>
    %9 = arith.mulf %8, %7 : vector<8x256xf32>
    %c0_9 = arith.constant 0 : index
    %c0_10 = arith.constant 0 : index
    %10 = vector.load %arg7[%c0_9, %c0_10] : memref<64x256xf32, #tpu.memory_space<vmem>>, vector<8x256xf32>
    %11 = arith.addf %9, %10 : vector<8x256xf32>
    %cst_11 = arith.constant 1.000000e-01 : f32
    %12 = vector.broadcast %cst_11 : f32 to vector<8x256xf32>
    %13 = arith.cmpf ogt, %7, %12 : vector<8x256xf32>
    %cst_12 = arith.constant 1.000000e-01 : f32
    %14 = vector.broadcast %cst_12 : f32 to vector<8x256xf32>
    %15 = arith.subf %11, %14 : vector<8x256xf32>
    %16 = arith.select %13, %15, %11 : vector<8x256xi1>, vector<8x256xf32>
    %cst_13 = arith.constant 1.000000e-01 : f32
    %17 = vector.broadcast %cst_13 : f32 to vector<8x256xf32>
    %18 = arith.cmpf ogt, %16, %17 : vector<8x256xf32>
    %19 = arith.extui %18 : vector<8x256xi1> to vector<8x256xi32>
    %20 = arith.sitofp %19 : vector<8x256xi32> to vector<8x256xf32>
    %c0_14 = arith.constant 0 : index
    %c0_15 = arith.constant 0 : index
    %21 = vector.load %arg8[%c0_14, %c0_15] : memref<64x256xf32, #tpu.memory_space<vmem>>, vector<8x256xf32>
    tpu.vector_store %arg8[%c0_14, %c0_15], %20 {strides = array<i32>} : memref<64x256xf32, #tpu.memory_space<vmem>>, vector<8x256xf32>,
    %cst_16 = arith.constant 5.000000e-01 : f32
    %22 = vector.broadcast %cst_16 : f32 to vector<8x256xf32>
    %23 = arith.mulf %22, %16 : vector<8x256xf32>
    %c8 = arith.constant 8 : index
    %c0_17 = arith.constant 0 : index
    %24 = vector.load %arg7[%c8, %c0_17] : memref<64x256xf32, #tpu.memory_space<vmem>>, vector<8x256xf32>
    %25 = arith.addf %23, %24 : vector<8x256xf32>
    %cst_18 = arith.constant 1.000000e-01 : f32
    %26 = vector.broadcast %cst_18 : f32 to vector<8x256xf32>
    %27 = arith.cmpf ogt, %16, %26 : vector<8x256xf32>
    %cst_19 = arith.constant 1.000000e-01 : f32
    %28 = vector.broadcast %cst_19 : f32 to vector<8x256xf32>
    %29 = arith.subf %25, %28 : vector<8x256xf32>
    %30 = arith.select %27, %29, %25 : vector<8x256xi1>, vector<8x256xf32>
    %cst_20 = arith.constant 1.000000e-01 : f32
    %31 = vector.broadcast %cst_20 : f32 to vector<8x256xf32>
    %32 = arith.cmpf ogt, %30, %31 : vector<8x256xf32>
    %33 = arith.extui %32 : vector<8x256xi1> to vector<8x256xi32>
    %34 = arith.sitofp %33 : vector<8x256xi32> to vector<8x256xf32>
    %c8_21 = arith.constant 8 : index
    %c0_22 = arith.constant 0 : index
    %35 = vector.load %arg8[%c8_21, %c0_22] : memref<64x256xf32, #tpu.memory_space<vmem>>, vector<8x256xf32>
    tpu.vector_store %arg8[%c8_21, %c0_22], %34 {strides = array<i32>} : memref<64x256xf32, #tpu.memory_space<vmem>>, vector<8x256xf32>,
    %cst_23 = arith.constant 5.000000e-01 : f32
    %36 = vector.broadcast %cst_23 : f32 to vector<8x256xf32>
    %37 = arith.mulf %36, %30 : vector<8x256xf32>
    %c16 = arith.constant 16 : index
    %c0_24 = arith.constant 0 : index
    %38 = vector.load %arg7[%c16, %c0_24] : memref<64x256xf32, #tpu.memory_space<vmem>>, vector<8x256xf32>
    %39 = arith.addf %37, %38 : vector<8x256xf32>
    %cst_25 = arith.constant 1.000000e-01 : f32
    %40 = vector.broadcast %cst_25 : f32 to vector<8x256xf32>
    %41 = arith.cmpf ogt, %30, %40 : vector<8x256xf32>
    %cst_26 = arith.constant 1.000000e-01 : f32
    %42 = vector.broadcast %cst_26 : f32 to vector<8x256xf32>
    %43 = arith.subf %39, %42 : vector<8x256xf32>
    %44 = arith.select %41, %43, %39 : vector<8x256xi1>, vector<8x256xf32>
    %cst_27 = arith.constant 1.000000e-01 : f32
    %45 = vector.broadcast %cst_27 : f32 to vector<8x256xf32>
    %46 = arith.cmpf ogt, %44, %45 : vector<8x256xf32>
    %47 = arith.extui %46 : vector<8x256xi1> to vector<8x256xi32>
    %48 = arith.sitofp %47 : vector<8x256xi32> to vector<8x256xf32>
    %c16_28 = arith.constant 16 : index
    %c0_29 = arith.constant 0 : index
    %49 = vector.load %arg8[%c16_28, %c0_29] : memref<64x256xf32, #tpu.memory_space<vmem>>, vector<8x256xf32>
    tpu.vector_store %arg8[%c16_28, %c0_29], %48 {strides = array<i32>} : memref<64x256xf32, #tpu.memory_space<vmem>>, vector<8x256xf32>,
    %cst_30 = arith.constant 5.000000e-01 : f32
    %50 = vector.broadcast %cst_30 : f32 to vector<8x256xf32>
    %51 = arith.mulf %50, %44 : vector<8x256xf32>
    %c24 = arith.constant 24 : index
    %c0_31 = arith.constant 0 : index
    %52 = vector.load %arg7[%c24, %c0_31] : memref<64x256xf32, #tpu.memory_space<vmem>>, vector<8x256xf32>
    %53 = arith.addf %51, %52 : vector<8x256xf32>
    %cst_32 = arith.constant 1.000000e-01 : f32
    %54 = vector.broadcast %cst_32 : f32 to vector<8x256xf32>
    %55 = arith.cmpf ogt, %44, %54 : vector<8x256xf32>
    %cst_33 = arith.constant 1.000000e-01 : f32
    %56 = vector.broadcast %cst_33 : f32 to vector<8x256xf32>
    %57 = arith.subf %53, %56 : vector<8x256xf32>
    %58 = arith.select %55, %57, %53 : vector<8x256xi1>, vector<8x256xf32>
    %cst_34 = arith.constant 1.000000e-01 : f32
    %59 = vector.broadcast %cst_34 : f32 to vector<8x256xf32>
    %60 = arith.cmpf ogt, %58, %59 : vector<8x256xf32>
    %61 = arith.extui %60 : vector<8x256xi1> to vector<8x256xi32>
    %62 = arith.sitofp %61 : vector<8x256xi32> to vector<8x256xf32>
    %c24_35 = arith.constant 24 : index
    %c0_36 = arith.constant 0 : index
    %63 = vector.load %arg8[%c24_35, %c0_36] : memref<64x256xf32, #tpu.memory_space<vmem>>, vector<8x256xf32>
    tpu.vector_store %arg8[%c24_35, %c0_36], %62 {strides = array<i32>} : memref<64x256xf32, #tpu.memory_space<vmem>>, vector<8x256xf32>,
    %cst_37 = arith.constant 5.000000e-01 : f32
    %64 = vector.broadcast %cst_37 : f32 to vector<8x256xf32>
    %65 = arith.mulf %64, %58 : vector<8x256xf32>
    %c32 = arith.constant 32 : index
    %c0_38 = arith.constant 0 : index
    %66 = vector.load %arg7[%c32, %c0_38] : memref<64x256xf32, #tpu.memory_space<vmem>>, vector<8x256xf32>
    %67 = arith.addf %65, %66 : vector<8x256xf32>
    %cst_39 = arith.constant 1.000000e-01 : f32
    %68 = vector.broadcast %cst_39 : f32 to vector<8x256xf32>
    %69 = arith.cmpf ogt, %58, %68 : vector<8x256xf32>
    %cst_40 = arith.constant 1.000000e-01 : f32
    %70 = vector.broadcast %cst_40 : f32 to vector<8x256xf32>
    %71 = arith.subf %67, %70 : vector<8x256xf32>
    %72 = arith.select %69, %71, %67 : vector<8x256xi1>, vector<8x256xf32>
    %cst_41 = arith.constant 1.000000e-01 : f32
    %73 = vector.broadcast %cst_41 : f32 to vector<8x256xf32>
    %74 = arith.cmpf ogt, %72, %73 : vector<8x256xf32>
    %75 = arith.extui %74 : vector<8x256xi1> to vector<8x256xi32>
    %76 = arith.sitofp %75 : vector<8x256xi32> to vector<8x256xf32>
    %c32_42 = arith.constant 32 : index
    %c0_43 = arith.constant 0 : index
    %77 = vector.load %arg8[%c32_42, %c0_43] : memref<64x256xf32, #tpu.memory_space<vmem>>, vector<8x256xf32>
    tpu.vector_store %arg8[%c32_42, %c0_43], %76 {strides = array<i32>} : memref<64x256xf32, #tpu.memory_space<vmem>>, vector<8x256xf32>,
    %cst_44 = arith.constant 5.000000e-01 : f32
    %78 = vector.broadcast %cst_44 : f32 to vector<8x256xf32>
    %79 = arith.mulf %78, %72 : vector<8x256xf32>
    %c40 = arith.constant 40 : index
    %c0_45 = arith.constant 0 : index
    %80 = vector.load %arg7[%c40, %c0_45] : memref<64x256xf32, #tpu.memory_space<vmem>>, vector<8x256xf32>
    %81 = arith.addf %79, %80 : vector<8x256xf32>
    %cst_46 = arith.constant 1.000000e-01 : f32
    %82 = vector.broadcast %cst_46 : f32 to vector<8x256xf32>
    %83 = arith.cmpf ogt, %72, %82 : vector<8x256xf32>
    %cst_47 = arith.constant 1.000000e-01 : f32
    %84 = vector.broadcast %cst_47 : f32 to vector<8x256xf32>
    %85 = arith.subf %81, %84 : vector<8x256xf32>
    %86 = arith.select %83, %85, %81 : vector<8x256xi1>, vector<8x256xf32>
    %cst_48 = arith.constant 1.000000e-01 : f32
    %87 = vector.broadcast %cst_48 : f32 to vector<8x256xf32>
    %88 = arith.cmpf ogt, %86, %87 : vector<8x256xf32>
    %89 = arith.extui %88 : vector<8x256xi1> to vector<8x256xi32>
    %90 = arith.sitofp %89 : vector<8x256xi32> to vector<8x256xf32>
    %c40_49 = arith.constant 40 : index
    %c0_50 = arith.constant 0 : index
    %91 = vector.load %arg8[%c40_49, %c0_50] : memref<64x256xf32, #tpu.memory_space<vmem>>, vector<8x256xf32>
    tpu.vector_store %arg8[%c40_49, %c0_50], %90 {strides = array<i32>} : memref<64x256xf32, #tpu.memory_space<vmem>>, vector<8x256xf32>,
    %cst_51 = arith.constant 5.000000e-01 : f32
    %92 = vector.broadcast %cst_51 : f32 to vector<8x256xf32>
    %93 = arith.mulf %92, %86 : vector<8x256xf32>
    %c48 = arith.constant 48 : index
    %c0_52 = arith.constant 0 : index
    %94 = vector.load %arg7[%c48, %c0_52] : memref<64x256xf32, #tpu.memory_space<vmem>>, vector<8x256xf32>
    %95 = arith.addf %93, %94 : vector<8x256xf32>
    %cst_53 = arith.constant 1.000000e-01 : f32
    %96 = vector.broadcast %cst_53 : f32 to vector<8x256xf32>
    %97 = arith.cmpf ogt, %86, %96 : vector<8x256xf32>
    %cst_54 = arith.constant 1.000000e-01 : f32
    %98 = vector.broadcast %cst_54 : f32 to vector<8x256xf32>
    %99 = arith.subf %95, %98 : vector<8x256xf32>
    %100 = arith.select %97, %99, %95 : vector<8x256xi1>, vector<8x256xf32>
    %cst_55 = arith.constant 1.000000e-01 : f32
    %101 = vector.broadcast %cst_55 : f32 to vector<8x256xf32>
    %102 = arith.cmpf ogt, %100, %101 : vector<8x256xf32>
    %103 = arith.extui %102 : vector<8x256xi1> to vector<8x256xi32>
    %104 = arith.sitofp %103 : vector<8x256xi32> to vector<8x256xf32>
    %c48_56 = arith.constant 48 : index
    %c0_57 = arith.constant 0 : index
    %105 = vector.load %arg8[%c48_56, %c0_57] : memref<64x256xf32, #tpu.memory_space<vmem>>, vector<8x256xf32>
    tpu.vector_store %arg8[%c48_56, %c0_57], %104 {strides = array<i32>} : memref<64x256xf32, #tpu.memory_space<vmem>>, vector<8x256xf32>,
    %cst_58 = arith.constant 5.000000e-01 : f32
    %106 = vector.broadcast %cst_58 : f32 to vector<8x256xf32>
    %107 = arith.mulf %106, %100 : vector<8x256xf32>
    %c56 = arith.constant 56 : index
    %c0_59 = arith.constant 0 : index
    %108 = vector.load %arg7[%c56, %c0_59] : memref<64x256xf32, #tpu.memory_space<vmem>>, vector<8x256xf32>
    %109 = arith.addf %107, %108 : vector<8x256xf32>
    %cst_60 = arith.constant 1.000000e-01 : f32
    %110 = vector.broadcast %cst_60 : f32 to vector<8x256xf32>
    %111 = arith.cmpf ogt, %100, %110 : vector<8x256xf32>
    %cst_61 = arith.constant 1.000000e-01 : f32
    %112 = vector.broadcast %cst_61 : f32 to vector<8x256xf32>
    %113 = arith.subf %109, %112 : vector<8x256xf32>
    %114 = arith.select %111, %113, %109 : vector<8x256xi1>, vector<8x256xf32>
    %cst_62 = arith.constant 1.000000e-01 : f32
    %115 = vector.broadcast %cst_62 : f32 to vector<8x256xf32>
    %116 = arith.cmpf ogt, %114, %115 : vector<8x256xf32>
    %117 = arith.extui %116 : vector<8x256xi1> to vector<8x256xi32>
    %118 = arith.sitofp %117 : vector<8x256xi32> to vector<8x256xf32>
    %c56_63 = arith.constant 56 : index
    %c0_64 = arith.constant 0 : index
    %119 = vector.load %arg8[%c56_63, %c0_64] : memref<64x256xf32, #tpu.memory_space<vmem>>, vector<8x256xf32>
    tpu.vector_store %arg8[%c56_63, %c0_64], %118 {strides = array<i32>} : memref<64x256xf32, #tpu.memory_space<vmem>>, vector<8x256xf32>,
    %c0_65 = arith.constant 0 : index
    %c0_66 = arith.constant 0 : index
    %120 = vector.load %arg8[%c0_65, %c0_66] : memref<64x256xf32, #tpu.memory_space<vmem>>, vector<64x256xf32>
    %c0_67 = arith.constant 0 : index
    %c0_68 = arith.constant 0 : index
    %121 = vector.load %arg4[%c0_67, %c0_68] : memref<256x128xf32, #tpu.memory_space<vmem>>, vector<256x128xf32>
    %cst_69 = arith.constant dense<0.000000e+00> : vector<64x128xf32>
    %122 = tpu.matmul %120, %121, %cst_69 {dimension_numbers = #tpu.dot_dimension_numbers<[1], [0], [0], [1], [0, 0, 1, 1], [], []>} : vector<64x256xf32>, vector<256x128xf32>, vector<64x128xf32> -> vector<64x128xf32>
    %c0_70 = arith.constant 0 : index
    %c0_71 = arith.constant 0 : index
    %123 = vector.load %arg5[%c0_70, %c0_71] : memref<1x128xf32, #tpu.memory_space<vmem>>, vector<1x128xf32>
    %124 = vector.broadcast %123 : vector<1x128xf32> to vector<64x128xf32>
    %125 = arith.addf %122, %124 : vector<64x128xf32>
    %c0_72 = arith.constant 0 : index
    %c0_73 = arith.constant 0 : index
    %126 = vector.load %arg9[%c0_72, %c0_73] : memref<64x128xf32, #tpu.memory_space<vmem>>, vector<64x128xf32>
    tpu.vector_store %arg9[%c0_72, %c0_73], %125 {strides = array<i32>} : memref<64x128xf32, #tpu.memory_space<vmem>>, vector<64x128xf32>,
    %cst_74 = arith.constant 0.000000e+00 : f32
    %127 = vector.broadcast %cst_74 : f32 to vector<8x128xf32>
    %cst_75 = arith.constant 5.000000e-01 : f32
    %128 = vector.broadcast %cst_75 : f32 to vector<8x128xf32>
    %129 = arith.mulf %128, %127 : vector<8x128xf32>
    %c0_76 = arith.constant 0 : index
    %c0_77 = arith.constant 0 : index
    %130 = vector.load %arg9[%c0_76, %c0_77] : memref<64x128xf32, #tpu.memory_space<vmem>>, vector<8x128xf32>
    %131 = arith.addf %129, %130 : vector<8x128xf32>
    %cst_78 = arith.constant 1.000000e-01 : f32
    %132 = vector.broadcast %cst_78 : f32 to vector<8x128xf32>
    %133 = arith.cmpf ogt, %127, %132 : vector<8x128xf32>
    %cst_79 = arith.constant 1.000000e-01 : f32
    %134 = vector.broadcast %cst_79 : f32 to vector<8x128xf32>
    %135 = arith.subf %131, %134 : vector<8x128xf32>
    %136 = arith.select %133, %135, %131 : vector<8x128xi1>, vector<8x128xf32>
    %cst_80 = arith.constant 1.000000e-01 : f32
    %137 = vector.broadcast %cst_80 : f32 to vector<8x128xf32>
    %138 = arith.cmpf ogt, %136, %137 : vector<8x128xf32>
    %139 = arith.extui %138 : vector<8x128xi1> to vector<8x128xi32>
    %140 = arith.sitofp %139 : vector<8x128xi32> to vector<8x128xf32>
    %c0_81 = arith.constant 0 : index
    %c0_82 = arith.constant 0 : index
    %141 = vector.load %arg6[%c0_81, %c0_82] : memref<64x128xf32, #tpu.memory_space<vmem>>, vector<8x128xf32>
    tpu.vector_store %arg6[%c0_81, %c0_82], %140 {strides = array<i32>} : memref<64x128xf32, #tpu.memory_space<vmem>>, vector<8x128xf32>,
    %cst_83 = arith.constant 5.000000e-01 : f32
    %142 = vector.broadcast %cst_83 : f32 to vector<8x128xf32>
    %143 = arith.mulf %142, %136 : vector<8x128xf32>
    %c8_84 = arith.constant 8 : index
    %c0_85 = arith.constant 0 : index
    %144 = vector.load %arg9[%c8_84, %c0_85] : memref<64x128xf32, #tpu.memory_space<vmem>>, vector<8x128xf32>
    %145 = arith.addf %143, %144 : vector<8x128xf32>
    %cst_86 = arith.constant 1.000000e-01 : f32
    %146 = vector.broadcast %cst_86 : f32 to vector<8x128xf32>
    %147 = arith.cmpf ogt, %136, %146 : vector<8x128xf32>
    %cst_87 = arith.constant 1.000000e-01 : f32
    %148 = vector.broadcast %cst_87 : f32 to vector<8x128xf32>
    %149 = arith.subf %145, %148 : vector<8x128xf32>
    %150 = arith.select %147, %149, %145 : vector<8x128xi1>, vector<8x128xf32>
    %cst_88 = arith.constant 1.000000e-01 : f32
    %151 = vector.broadcast %cst_88 : f32 to vector<8x128xf32>
    %152 = arith.cmpf ogt, %150, %151 : vector<8x128xf32>
    %153 = arith.extui %152 : vector<8x128xi1> to vector<8x128xi32>
    %154 = arith.sitofp %153 : vector<8x128xi32> to vector<8x128xf32>
    %c8_89 = arith.constant 8 : index
    %c0_90 = arith.constant 0 : index
    %155 = vector.load %arg6[%c8_89, %c0_90] : memref<64x128xf32, #tpu.memory_space<vmem>>, vector<8x128xf32>
    tpu.vector_store %arg6[%c8_89, %c0_90], %154 {strides = array<i32>} : memref<64x128xf32, #tpu.memory_space<vmem>>, vector<8x128xf32>,
    %cst_91 = arith.constant 5.000000e-01 : f32
    %156 = vector.broadcast %cst_91 : f32 to vector<8x128xf32>
    %157 = arith.mulf %156, %150 : vector<8x128xf32>
    %c16_92 = arith.constant 16 : index
    %c0_93 = arith.constant 0 : index
    %158 = vector.load %arg9[%c16_92, %c0_93] : memref<64x128xf32, #tpu.memory_space<vmem>>, vector<8x128xf32>
    %159 = arith.addf %157, %158 : vector<8x128xf32>
    %cst_94 = arith.constant 1.000000e-01 : f32
    %160 = vector.broadcast %cst_94 : f32 to vector<8x128xf32>
    %161 = arith.cmpf ogt, %150, %160 : vector<8x128xf32>
    %cst_95 = arith.constant 1.000000e-01 : f32
    %162 = vector.broadcast %cst_95 : f32 to vector<8x128xf32>
    %163 = arith.subf %159, %162 : vector<8x128xf32>
    %164 = arith.select %161, %163, %159 : vector<8x128xi1>, vector<8x128xf32>
    %cst_96 = arith.constant 1.000000e-01 : f32
    %165 = vector.broadcast %cst_96 : f32 to vector<8x128xf32>
    %166 = arith.cmpf ogt, %164, %165 : vector<8x128xf32>
    %167 = arith.extui %166 : vector<8x128xi1> to vector<8x128xi32>
    %168 = arith.sitofp %167 : vector<8x128xi32> to vector<8x128xf32>
    %c16_97 = arith.constant 16 : index
    %c0_98 = arith.constant 0 : index
    %169 = vector.load %arg6[%c16_97, %c0_98] : memref<64x128xf32, #tpu.memory_space<vmem>>, vector<8x128xf32>
    tpu.vector_store %arg6[%c16_97, %c0_98], %168 {strides = array<i32>} : memref<64x128xf32, #tpu.memory_space<vmem>>, vector<8x128xf32>,
    %cst_99 = arith.constant 5.000000e-01 : f32
    %170 = vector.broadcast %cst_99 : f32 to vector<8x128xf32>
    %171 = arith.mulf %170, %164 : vector<8x128xf32>
    %c24_100 = arith.constant 24 : index
    %c0_101 = arith.constant 0 : index
    %172 = vector.load %arg9[%c24_100, %c0_101] : memref<64x128xf32, #tpu.memory_space<vmem>>, vector<8x128xf32>
    %173 = arith.addf %171, %172 : vector<8x128xf32>
    %cst_102 = arith.constant 1.000000e-01 : f32
    %174 = vector.broadcast %cst_102 : f32 to vector<8x128xf32>
    %175 = arith.cmpf ogt, %164, %174 : vector<8x128xf32>
    %cst_103 = arith.constant 1.000000e-01 : f32
    %176 = vector.broadcast %cst_103 : f32 to vector<8x128xf32>
    %177 = arith.subf %173, %176 : vector<8x128xf32>
    %178 = arith.select %175, %177, %173 : vector<8x128xi1>, vector<8x128xf32>
    %cst_104 = arith.constant 1.000000e-01 : f32
    %179 = vector.broadcast %cst_104 : f32 to vector<8x128xf32>
    %180 = arith.cmpf ogt, %178, %179 : vector<8x128xf32>
    %181 = arith.extui %180 : vector<8x128xi1> to vector<8x128xi32>
    %182 = arith.sitofp %181 : vector<8x128xi32> to vector<8x128xf32>
    %c24_105 = arith.constant 24 : index
    %c0_106 = arith.constant 0 : index
    %183 = vector.load %arg6[%c24_105, %c0_106] : memref<64x128xf32, #tpu.memory_space<vmem>>, vector<8x128xf32>
    tpu.vector_store %arg6[%c24_105, %c0_106], %182 {strides = array<i32>} : memref<64x128xf32, #tpu.memory_space<vmem>>, vector<8x128xf32>,
    %cst_107 = arith.constant 5.000000e-01 : f32
    %184 = vector.broadcast %cst_107 : f32 to vector<8x128xf32>
    %185 = arith.mulf %184, %178 : vector<8x128xf32>
    %c32_108 = arith.constant 32 : index
    %c0_109 = arith.constant 0 : index
    %186 = vector.load %arg9[%c32_108, %c0_109] : memref<64x128xf32, #tpu.memory_space<vmem>>, vector<8x128xf32>
    %187 = arith.addf %185, %186 : vector<8x128xf32>
    %cst_110 = arith.constant 1.000000e-01 : f32
    %188 = vector.broadcast %cst_110 : f32 to vector<8x128xf32>
    %189 = arith.cmpf ogt, %178, %188 : vector<8x128xf32>
    %cst_111 = arith.constant 1.000000e-01 : f32
    %190 = vector.broadcast %cst_111 : f32 to vector<8x128xf32>
    %191 = arith.subf %187, %190 : vector<8x128xf32>
    %192 = arith.select %189, %191, %187 : vector<8x128xi1>, vector<8x128xf32>
    %cst_112 = arith.constant 1.000000e-01 : f32
    %193 = vector.broadcast %cst_112 : f32 to vector<8x128xf32>
    %194 = arith.cmpf ogt, %192, %193 : vector<8x128xf32>
    %195 = arith.extui %194 : vector<8x128xi1> to vector<8x128xi32>
    %196 = arith.sitofp %195 : vector<8x128xi32> to vector<8x128xf32>
    %c32_113 = arith.constant 32 : index
    %c0_114 = arith.constant 0 : index
    %197 = vector.load %arg6[%c32_113, %c0_114] : memref<64x128xf32, #tpu.memory_space<vmem>>, vector<8x128xf32>
    tpu.vector_store %arg6[%c32_113, %c0_114], %196 {strides = array<i32>} : memref<64x128xf32, #tpu.memory_space<vmem>>, vector<8x128xf32>,
    %cst_115 = arith.constant 5.000000e-01 : f32
    %198 = vector.broadcast %cst_115 : f32 to vector<8x128xf32>
    %199 = arith.mulf %198, %192 : vector<8x128xf32>
    %c40_116 = arith.constant 40 : index
    %c0_117 = arith.constant 0 : index
    %200 = vector.load %arg9[%c40_116, %c0_117] : memref<64x128xf32, #tpu.memory_space<vmem>>, vector<8x128xf32>
    %201 = arith.addf %199, %200 : vector<8x128xf32>
    %cst_118 = arith.constant 1.000000e-01 : f32
    %202 = vector.broadcast %cst_118 : f32 to vector<8x128xf32>
    %203 = arith.cmpf ogt, %192, %202 : vector<8x128xf32>
    %cst_119 = arith.constant 1.000000e-01 : f32
    %204 = vector.broadcast %cst_119 : f32 to vector<8x128xf32>
    %205 = arith.subf %201, %204 : vector<8x128xf32>
    %206 = arith.select %203, %205, %201 : vector<8x128xi1>, vector<8x128xf32>
    %cst_120 = arith.constant 1.000000e-01 : f32
    %207 = vector.broadcast %cst_120 : f32 to vector<8x128xf32>
    %208 = arith.cmpf ogt, %206, %207 : vector<8x128xf32>
    %209 = arith.extui %208 : vector<8x128xi1> to vector<8x128xi32>
    %210 = arith.sitofp %209 : vector<8x128xi32> to vector<8x128xf32>
    %c40_121 = arith.constant 40 : index
    %c0_122 = arith.constant 0 : index
    %211 = vector.load %arg6[%c40_121, %c0_122] : memref<64x128xf32, #tpu.memory_space<vmem>>, vector<8x128xf32>
    tpu.vector_store %arg6[%c40_121, %c0_122], %210 {strides = array<i32>} : memref<64x128xf32, #tpu.memory_space<vmem>>, vector<8x128xf32>,
    %cst_123 = arith.constant 5.000000e-01 : f32
    %212 = vector.broadcast %cst_123 : f32 to vector<8x128xf32>
    %213 = arith.mulf %212, %206 : vector<8x128xf32>
    %c48_124 = arith.constant 48 : index
    %c0_125 = arith.constant 0 : index
    %214 = vector.load %arg9[%c48_124, %c0_125] : memref<64x128xf32, #tpu.memory_space<vmem>>, vector<8x128xf32>
    %215 = arith.addf %213, %214 : vector<8x128xf32>
    %cst_126 = arith.constant 1.000000e-01 : f32
    %216 = vector.broadcast %cst_126 : f32 to vector<8x128xf32>
    %217 = arith.cmpf ogt, %206, %216 : vector<8x128xf32>
    %cst_127 = arith.constant 1.000000e-01 : f32
    %218 = vector.broadcast %cst_127 : f32 to vector<8x128xf32>
    %219 = arith.subf %215, %218 : vector<8x128xf32>
    %220 = arith.select %217, %219, %215 : vector<8x128xi1>, vector<8x128xf32>
    %cst_128 = arith.constant 1.000000e-01 : f32
    %221 = vector.broadcast %cst_128 : f32 to vector<8x128xf32>
    %222 = arith.cmpf ogt, %220, %221 : vector<8x128xf32>
    %223 = arith.extui %222 : vector<8x128xi1> to vector<8x128xi32>
    %224 = arith.sitofp %223 : vector<8x128xi32> to vector<8x128xf32>
    %c48_129 = arith.constant 48 : index
    %c0_130 = arith.constant 0 : index
    %225 = vector.load %arg6[%c48_129, %c0_130] : memref<64x128xf32, #tpu.memory_space<vmem>>, vector<8x128xf32>
    tpu.vector_store %arg6[%c48_129, %c0_130], %224 {strides = array<i32>} : memref<64x128xf32, #tpu.memory_space<vmem>>, vector<8x128xf32>,
    %cst_131 = arith.constant 5.000000e-01 : f32
    %226 = vector.broadcast %cst_131 : f32 to vector<8x128xf32>
    %227 = arith.mulf %226, %220 : vector<8x128xf32>
    %c56_132 = arith.constant 56 : index
    %c0_133 = arith.constant 0 : index
    %228 = vector.load %arg9[%c56_132, %c0_133] : memref<64x128xf32, #tpu.memory_space<vmem>>, vector<8x128xf32>
    %229 = arith.addf %227, %228 : vector<8x128xf32>
    %cst_134 = arith.constant 1.000000e-01 : f32
    %230 = vector.broadcast %cst_134 : f32 to vector<8x128xf32>
    %231 = arith.cmpf ogt, %220, %230 : vector<8x128xf32>
    %cst_135 = arith.constant 1.000000e-01 : f32
    %232 = vector.broadcast %cst_135 : f32 to vector<8x128xf32>
    %233 = arith.subf %229, %232 : vector<8x128xf32>
    %234 = arith.select %231, %233, %229 : vector<8x128xi1>, vector<8x128xf32>
    %cst_136 = arith.constant 1.000000e-01 : f32
    %235 = vector.broadcast %cst_136 : f32 to vector<8x128xf32>
    %236 = arith.cmpf ogt, %234, %235 : vector<8x128xf32>
    %237 = arith.extui %236 : vector<8x128xi1> to vector<8x128xi32>
    %238 = arith.sitofp %237 : vector<8x128xi32> to vector<8x128xf32>
    %c56_137 = arith.constant 56 : index
    %c0_138 = arith.constant 0 : index
    %239 = vector.load %arg6[%c56_137, %c0_138] : memref<64x128xf32, #tpu.memory_space<vmem>>, vector<8x128xf32>
    tpu.vector_store %arg6[%c56_137, %c0_138], %238 {strides = array<i32>} : memref<64x128xf32, #tpu.memory_space<vmem>>, vector<8x128xf32>,
    return
  }
  func.func @transform_0(%arg0: i32) -> (i32, i32) {
    %c0_i32 = arith.constant 0 : i32
    %c0_i32_0 = arith.constant 0 : i32
    %c0_i32_1 = arith.constant 0 : i32
    return %c0_i32, %c0_i32_0 : i32, i32
  }
  func.func @transform_1(%arg0: i32) -> (i32, i32) {
    %c0_i32 = arith.constant 0 : i32
    %c0_i32_0 = arith.constant 0 : i32
    %c0_i32_1 = arith.constant 0 : i32
    return %c0_i32, %c0_i32_0 : i32, i32
  }
  func.func @transform_2(%arg0: i32) -> (i32, i32) {
    %c0_i32 = arith.constant 0 : i32
    %c0_i32_0 = arith.constant 0 : i32
    %c0_i32_1 = arith.constant 0 : i32
    return %c0_i32, %c0_i32_0 : i32, i32
  }
  func.func @transform_3(%arg0: i32) -> (i32, i32) {
    %c0_i32 = arith.constant 0 : i32
    %c0_i32_0 = arith.constant 0 : i32
    %c0_i32_1 = arith.constant 0 : i32
    return %c0_i32, %c0_i32_0 : i32, i32
  }
  func.func @transform_4(%arg0: i32) -> (i32, i32) {
    %c0_i32 = arith.constant 0 : i32
    %c0_i32_0 = arith.constant 0 : i32
    %c0_i32_1 = arith.constant 0 : i32
    return %c0_i32, %c0_i32_0 : i32, i32
  }
  func.func @transform_5(%arg0: i32) -> (i32, i32) {
    %c0_i32 = arith.constant 0 : i32
    %c0_i32_0 = arith.constant 0 : i32
    %c0_i32_1 = arith.constant 0 : i32
    return %c0_i32, %c0_i32_0 : i32, i32
  }
}

</mosaic_0001>

<llo_original>
// kernel: tpu_custom_call.1
$region0: #{tpu_custom_call.1}
  #allocation0 [shape = 'u32[]', space=smem, size = 0x4, offset = 0x4, fixed_abs, tag = 'smem constant byte address 0x4 - core index']
  #allocation1 [shape = 'u32[144,128]{1,0:T(1,128)}', space=vmem, size = 0x12000, scoped, tag = 'internal scratch']
  #allocation2 [shape = 'f32[64,256]{1,0:T(8,128)}', space=vmem, size = 0x10000, scoped, tag = 'scratch operand']
  #allocation3 [shape = 'f32[64,256]{1,0:T(8,128)}', space=vmem, size = 0x10000, scoped, tag = 'scratch operand']
  #allocation4 [shape = 'f32[64,128]{1,0:T(8,128)}', space=vmem, size = 0x8000, scoped, tag = 'scratch operand']
  %s0 = inlined_call_operand.hbm [shape: f32[64,128], index: 0, kind: input, shape index: {}]
  %s1 = inlined_call_operand.hbm [shape: f32[128,256], index: 1, kind: input, shape index: {}]
  %s2 = inlined_call_operand.vmem [shape: f32[1,256], index: 2, kind: input, shape index: {}]
  %s3 = inlined_call_operand.hbm [shape: f32[256,128], index: 3, kind: input, shape index: {}]
  %s4 = inlined_call_operand.vmem [shape: f32[1,128], index: 4, kind: input, shape index: {}]
  %s5 = inlined_call_operand.hbm [shape: f32[64,128], index: 5, kind: output, shape index: {}]
  %s6 = sld [smem:[#allocation0]]
  $region42: #{tpu_custom_call.1} parent=0
    _
  %s8 = ssub.s32 1, %s6
  %s9 = scalar_select 0, %s8, %s6
  $region1: #{tpu_custom_call.1} parent=0
    #allocation5 [shape = 'u8[32768]{0}', space=vmem, size = 0x8000, scoped, tag = 'input window, operand 0, single buffered']
    #allocation6 [shape = 's32[1]{0}', space=sflag, size = 0x4, scoped, tag = 'scoped memory for tpu_custom_call.1']
    #allocation7 [shape = 's32[1]{0}', space=sflag, size = 0x4, scoped, tag = 'scoped memory for tpu_custom_call.1']
    #allocation8 [shape = 'u8[131072]{0}', space=vmem, size = 0x20000, scoped, tag = 'input window, operand 1, single buffered']
    #allocation9 [shape = 's32[1]{0}', space=sflag, size = 0x4, scoped, tag = 'scoped memory for tpu_custom_call.1']
    #allocation10 [shape = 'u8[131072]{0}', space=vmem, size = 0x20000, scoped, tag = 'input window, operand 3, single buffered']
    #allocation11 [shape = 'u8[32768]{0}', space=vmem, size = 0x8000, scoped, tag = 'output window, operand 0, single buffered']
    %10 = vsyncpa [#allocation6], 0
    %11 = vsyncpa [#allocation9], 0
    %12 = vsyncpa [#allocation7], 0
    // Predicated region
    $region2: #{tpu_custom_call.1} parent=1 // pred_check
      _
    $region3: #{tpu_custom_call.1} parent=1 // pred_check_branch
      %14 = sbr.rel (0) target = $region5
    $region4: #{tpu_custom_call.1} parent=1 // pred_region
      %s16 = ssub.s32 1024, 1024
      %17 = vsyncadd [#allocation6], %s16
      %s18 = sshll.u32 [#allocation5], 4
      %s19 = int_to_ptr.vmem [resolvable:$true] %s18
      %24 = dma.hbm_to_vmem [thread:$0]  %s0, 1024, %s19, [#allocation6], 128, 128, 8
    $region5: #{tpu_custom_call.1} parent=1 // pred_fallthru
      _
    // Predicated region
    $region6: #{tpu_custom_call.1} parent=1 // pred_check
      _
    $region7: #{tpu_custom_call.1} parent=1 // pred_check_branch
      %26 = sbr.rel (0) target = $region9
    $region8: #{tpu_custom_call.1} parent=1 // pred_region
      %s28 = ssub.s32 4096, 4096
      %29 = vsyncadd [#allocation9], %s28
      %s30 = sshll.u32 [#allocation8], 4
      %s31 = int_to_ptr.vmem [resolvable:$true] %s30
      %36 = dma.hbm_to_vmem [thread:$0]  %s1, 4096, %s31, [#allocation9], 256, 256, 16
    $region9: #{tpu_custom_call.1} parent=1 // pred_fallthru
      _
    // Predicated region
    $region10: #{tpu_custom_call.1} parent=1 // pred_check
      _
    $region11: #{tpu_custom_call.1} parent=1 // pred_check_branch
      %38 = sbr.rel (0) target = $region13
    $region12: #{tpu_custom_call.1} parent=1 // pred_region
      _
    $region13: #{tpu_custom_call.1} parent=1 // pred_fallthru
      _
    // Predicated region
    $region14: #{tpu_custom_call.1} parent=1 // pred_check
      _
    $region15: #{tpu_custom_call.1} parent=1 // pred_check_branch
      %40 = sbr.rel (0) target = $region17
    $region16: #{tpu_custom_call.1} parent=1 // pred_region
      %s42 = ssub.s32 4096, 4096
      %43 = vsyncadd [#allocation9], %s42
      %s44 = sshll.u32 [#allocation10], 4
      %s45 = int_to_ptr.vmem [resolvable:$true] %s44
      %50 = dma.hbm_to_vmem [thread:$0]  %s3, 4096, %s45, [#allocation9], 128, 128, 8
    $region17: #{tpu_custom_call.1} parent=1 // pred_fallthru
      _
    // Predicated region
    $region18: #{tpu_custom_call.1} parent=1 // pred_check
      _
    $region19: #{tpu_custom_call.1} parent=1 // pred_check_branch
      %52 = sbr.rel (0) target = $region21
    $region20: #{tpu_custom_call.1} parent=1 // pred_region
      _
    $region21: #{tpu_custom_call.1} parent=1 // pred_fallthru
      _
    // Predicated region
    $region22: #{tpu_custom_call.1} parent=1 // pred_check
      _
    $region23: #{tpu_custom_call.1} parent=1 // pred_check_branch
      %54 = sbr.rel (0) target = $region25
    $region24: #{tpu_custom_call.1} parent=1 // pred_region
      %55 = dma.done [#allocation6], 1024
    $region25: #{tpu_custom_call.1} parent=1 // pred_fallthru
      _
    // Predicated region
    $region26: #{tpu_custom_call.1} parent=1 // pred_check
      _
    $region27: #{tpu_custom_call.1} parent=1 // pred_check_branch
      %57 = sbr.rel (0) target = $region29
    $region28: #{tpu_custom_call.1} parent=1 // pred_region
      %58 = dma.done [#allocation9], 4096
    $region29: #{tpu_custom_call.1} parent=1 // pred_fallthru
      _
    // Predicated region
    $region30: #{tpu_custom_call.1} parent=1 // pred_check
      _
    $region31: #{tpu_custom_call.1} parent=1 // pred_check_branch
      %60 = sbr.rel (0) target = $region33
    $region32: #{tpu_custom_call.1} parent=1 // pred_region
      %61 = dma.done [#allocation9], 4096
    $region33: #{tpu_custom_call.1} parent=1 // pred_fallthru
      _
    %v62 = vld [vmem:[#allocation5] sm:$0xff]
    %v63 = vld [vmem:[#allocation5 + $0x8] sm:$0xff]
    %v64 = vld [vmem:[#allocation5 + $0x10] sm:$0xff]
    %v65 = vld [vmem:[#allocation5 + $0x18] sm:$0xff]
    %v66 = vld [vmem:[#allocation5 + $0x20] sm:$0xff]
    %v67 = vld [vmem:[#allocation5 + $0x28] sm:$0xff]
    %v68 = vld [vmem:[#allocation5 + $0x30] sm:$0xff]
    %v69 = vld [vmem:[#allocation5 + $0x38] sm:$0xff]
    %v70 = vld [vmem:[#allocation8] sm:$0xff]
    %v71 = vld [vmem:[#allocation8 + $0x8] sm:$0xff]
    %v72 = vld [vmem:[#allocation8 + $0x10] sm:$0xff]
    %v73 = vld [vmem:[#allocation8 + $0x18] sm:$0xff]
    %v74 = vld [vmem:[#allocation8 + $0x20] sm:$0xff]
    %v75 = vld [vmem:[#allocation8 + $0x28] sm:$0xff]
    %v76 = vld [vmem:[#allocation8 + $0x30] sm:$0xff]
    %v77 = vld [vmem:[#allocation8 + $0x38] sm:$0xff]
    %v78 = vld [vmem:[#allocation8 + $0x40] sm:$0xff]
    %v79 = vld [vmem:[#allocation8 + $0x48] sm:$0xff]
    %v80 = vld [vmem:[#allocation8 + $0x50] sm:$0xff]
    %v81 = vld [vmem:[#allocation8 + $0x58] sm:$0xff]
    %v82 = vld [vmem:[#allocation8 + $0x60] sm:$0xff]
    %v83 = vld [vmem:[#allocation8 + $0x68] sm:$0xff]
    %v84 = vld [vmem:[#allocation8 + $0x70] sm:$0xff]
    %v85 = vld [vmem:[#allocation8 + $0x78] sm:$0xff]
    %v86 = vld [vmem:[#allocation8 + $0x80] sm:$0xff]
    %v87 = vld [vmem:[#allocation8 + $0x88] sm:$0xff]
    %v88 = vld [vmem:[#allocation8 + $0x90] sm:$0xff]
    %v89 = vld [vmem:[#allocation8 + $0x98] sm:$0xff]
    %v90 = vld [vmem:[#allocation8 + $0xa0] sm:$0xff]
    %v91 = vld [vmem:[#allocation8 + $0xa8] sm:$0xff]
    %v92 = vld [vmem:[#allocation8 + $0xb0] sm:$0xff]
    %v93 = vld [vmem:[#allocation8 + $0xb8] sm:$0xff]
    %v94 = vld [vmem:[#allocation8 + $0xc0] sm:$0xff]
    %v95 = vld [vmem:[#allocation8 + $0xc8] sm:$0xff]
    %v96 = vld [vmem:[#allocation8 + $0xd0] sm:$0xff]
    %v97 = vld [vmem:[#allocation8 + $0xd8] sm:$0xff]
    %v98 = vld [vmem:[#allocation8 + $0xe0] sm:$0xff]
    %v99 = vld [vmem:[#allocation8 + $0xe8] sm:$0xff]
    %v100 = vld [vmem:[#allocation8 + $0xf0] sm:$0xff]
    %v101 = vld [vmem:[#allocation8 + $0xf8] sm:$0xff]
    %v102 = vld [vmem:[%s2] sm:$0x3]
    %v104 = vlaneseq
    %v105 = vshrl.u32 %v104, 7
    %v106 = vsub.s32 0, %v105
    %v107 = vrot.slane %v102, %v106
    %v108 = vlaneseq
    %v109 = vshrl.u32 %v108, 7
    %v110 = vsub.s32 1, %v109
    %v111 = vrot.slane %v102, %v110
    %114 = vmatprep.subr.mxu0 %v101
    %115 = vmatpush1.msra.mxu0 %v100
    %116 = vmatprep.subr.mxu0 %v99
    %117 = vmatpush1.msra.mxu0 %v98
    %118 = vmatprep.subr.mxu0 %v97
    %119 = vmatpush1.msra.mxu0 %v96
    %120 = vmatprep.subr.mxu0 %v95
    %121 = vmatpush1.msra.mxu0 %v94
    %122 = vmatprep.subr.mxu0 %v93
    %123 = vmatpush1.msra.mxu0 %v92
    %124 = vmatprep.subr.mxu0 %v91
    %125 = vmatpush1.msra.mxu0 %v90
    %126 = vmatprep.subr.mxu0 %v89
    %127 = vmatpush1.msra.mxu0 %v88
    %128 = vmatprep.subr.mxu0 %v87
    %129 = vmatpush1.msra.mxu0 %v86
    %130 = vmatprep.subr.mxu0 %v85
    %131 = vmatpush1.msra.mxu0 %v84
    %132 = vmatprep.subr.mxu0 %v83
    %133 = vmatpush1.msra.mxu0 %v82
    %134 = vmatprep.subr.mxu0 %v81
    %135 = vmatpush1.msra.mxu0 %v80
    %136 = vmatprep.subr.mxu0 %v79
    %137 = vmatpush1.msra.mxu0 %v78
    %138 = vmatprep.subr.mxu0 %v77
    %139 = vmatpush1.msra.mxu0 %v76
    %140 = vmatprep.subr.mxu0 %v75
    %141 = vmatpush1.msra.mxu0 %v74
    %142 = vmatprep.subr.mxu0 %v73
    %143 = vmatpush1.msra.mxu0 %v72
    %144 = vmatprep.subr.mxu0 %v71
    %145 = vmatpush1.msra.mxu0 %v70
    %146 = vmatprep.subr.mxu0 0.0
    %147 = vmatpush2.msra.mxu0 0.0
    %148 = vmatprep.subr.mxu0 0.0
    %149 = vmatpush2.msra.mxu0 0.0
    %150 = vmatprep.subr.mxu0 0.0
    %151 = vmatpush2.msra.mxu0 0.0
    %152 = vmatprep.subr.mxu0 0.0
    %153 = vmatpush2.msra.mxu0 0.0
    %154 = vmatprep.subr.mxu0 0.0
    %155 = vmatpush2.msra.mxu0 0.0
    %156 = vmatprep.subr.mxu0 0.0
    %157 = vmatpush2.msra.mxu0 0.0
    %158 = vmatprep.subr.mxu0 0.0
    %159 = vmatpush2.msra.mxu0 0.0
    %160 = vmatprep.subr.mxu0 0.0
    %161 = vmatpush2.msra.mxu0 0.0
    %162 = vmatprep.subr.mxu0 0.0
    %163 = vmatpush2.msra.mxu0 0.0
    %164 = vmatprep.subr.mxu0 0.0
    %165 = vmatpush2.msra.mxu0 0.0
    %166 = vmatprep.subr.mxu0 0.0
    %167 = vmatpush2.msra.mxu0 0.0
    %168 = vmatprep.subr.mxu0 0.0
    %169 = vmatpush2.msra.mxu0 0.0
    %170 = vmatprep.subr.mxu0 0.0
    %171 = vmatpush2.msra.mxu0 0.0
    %172 = vmatprep.subr.mxu0 0.0
    %173 = vmatpush2.msra.mxu0 0.0
    %174 = vmatprep.subr.mxu0 0.0
    %175 = vmatpush2.msra.mxu0 0.0
    %176 = vmatprep.subr.mxu0 0.0
    %177 = vmatpush2.msra.mxu0 0.0
    %178 = vmatprep.mubr.f32.mxu0 0.0
    %179 = vmatmul.mubr.f32.gmra.mxu0 %v62
    %v180 = vpop.f32.mrf.mxu0
    %v181 = vadd.f32 %v107, %v180
    %v182 = vpop.f32.mrf.mxu0
    %v183 = vadd.f32 %v111, %v182
    %184 = vmatprep.mubr.f32.mxu0 0.0
    %185 = vmatmul.mubr.f32.gmra.mxu0 %v63
    %v186 = vpop.f32.mrf.mxu0
    %v187 = vadd.f32 %v107, %v186
    %v188 = vpop.f32.mrf.mxu0
    %v189 = vadd.f32 %v111, %v188
    %190 = vmatprep.mubr.f32.mxu0 0.0
    %191 = vmatmul.mubr.f32.gmra.mxu0 %v64
    %v192 = vpop.f32.mrf.mxu0
    %v193 = vadd.f32 %v107, %v192
    %v194 = vpop.f32.mrf.mxu0
    %v195 = vadd.f32 %v111, %v194
    %196 = vmatprep.mubr.f32.mxu0 0.0
    %197 = vmatmul.mubr.f32.gmra.mxu0 %v65
    %v198 = vpop.f32.mrf.mxu0
    %v199 = vadd.f32 %v107, %v198
    %v200 = vpop.f32.mrf.mxu0
    %v201 = vadd.f32 %v111, %v200
    %202 = vmatprep.mubr.f32.mxu0 0.0
    %203 = vmatmul.mubr.f32.gmra.mxu0 %v66
    %v204 = vpop.f32.mrf.mxu0
    %v205 = vadd.f32 %v107, %v204
    %v206 = vpop.f32.mrf.mxu0
    %v207 = vadd.f32 %v111, %v206
    %208 = vmatprep.mubr.f32.mxu0 0.0
    %209 = vmatmul.mubr.f32.gmra.mxu0 %v67
    %v210 = vpop.f32.mrf.mxu0
    %v211 = vadd.f32 %v107, %v210
    %v212 = vpop.f32.mrf.mxu0
    %v213 = vadd.f32 %v111, %v212
    %214 = vmatprep.mubr.f32.mxu0 0.0
    %215 = vmatmul.mubr.f32.gmra.mxu0 %v68
    %v216 = vpop.f32.mrf.mxu0
    %v217 = vadd.f32 %v107, %v216
    %v218 = vpop.f32.mrf.mxu0
    %v219 = vadd.f32 %v111, %v218
    %220 = vmatprep.mubr.f32.mxu0 0.0
    %221 = vmatmul.mubr.f32.gmra.mxu0 %v69
    %v222 = vpop.f32.mrf.mxu0
    %v223 = vadd.f32 %v107, %v222
    %v224 = vpop.f32.mrf.mxu0
    %v225 = vadd.f32 %v111, %v224
    %226 = vdwg.mxu0
    %227 = vst [vmem:[#allocation2] sm:$0xff] %v181
    %228 = vst [vmem:[#allocation2 + $0x8] sm:$0xff] %v183
    %229 = vst [vmem:[#allocation2 + $0x10] sm:$0xff] %v187
    %230 = vst [vmem:[#allocation2 + $0x18] sm:$0xff] %v189
    %231 = vst [vmem:[#allocation2 + $0x20] sm:$0xff] %v193
    %232 = vst [vmem:[#allocation2 + $0x28] sm:$0xff] %v195
    %233 = vst [vmem:[#allocation2 + $0x30] sm:$0xff] %v199
    %234 = vst [vmem:[#allocation2 + $0x38] sm:$0xff] %v201
    %235 = vst [vmem:[#allocation2 + $0x40] sm:$0xff] %v205
    %236 = vst [vmem:[#allocation2 + $0x48] sm:$0xff] %v207
    %237 = vst [vmem:[#allocation2 + $0x50] sm:$0xff] %v211
    %238 = vst [vmem:[#allocation2 + $0x58] sm:$0xff] %v213
    %239 = vst [vmem:[#allocation2 + $0x60] sm:$0xff] %v217
    %240 = vst [vmem:[#allocation2 + $0x68] sm:$0xff] %v219
    %241 = vst [vmem:[#allocation2 + $0x70] sm:$0xff] %v223
    %242 = vst [vmem:[#allocation2 + $0x78] sm:$0xff] %v225
    %v243 = vld [vmem:[#allocation2] sm:$0xff]
    %v244 = vld [vmem:[#allocation2 + $0x8] sm:$0xff]
    %v245 = vadd.f32 %v243, 0.0
    %v246 = vadd.f32 %v244, 0.0
    %vm247 = vcmp.gt.f32.partialorder 0.0, 0.1
    %v248 = vsub.f32 %v245, 0.1
    %v249 = vsub.f32 %v246, 0.1
    %v250 = vsel %vm247, %v248, %v245
    %v251 = vsel %vm247, %v249, %v246
    %vm252 = vcmp.gt.f32.partialorder %v250, 0.1
    %vm253 = vcmp.gt.f32.partialorder %v251, 0.1
    %v254 = vsel %vm252, 1, 0
    %v255 = vsel %vm253, 1, 0
    %v256 = vcvt.s32.f32 %v254
    %v257 = vcvt.s32.f32 %v255
    %258 = vst [vmem:[#allocation3] sm:$0xff] %v256
    %259 = vst [vmem:[#allocation3 + $0x8] sm:$0xff] %v257
    %v260 = vmul.f32 %v250, 0.5
    %v261 = vmul.f32 %v251, 0.5
    %v262 = vld [vmem:[#allocation2 + $0x10] sm:$0xff]
    %v263 = vld [vmem:[#allocation2 + $0x18] sm:$0xff]
    %v264 = vadd.f32 %v260, %v262
    %v265 = vadd.f32 %v261, %v263
    %v266 = vsub.f32 %v264, 0.1
    %v267 = vsub.f32 %v265, 0.1
    %v268 = vsel %vm252, %v266, %v264
    %v269 = vsel %vm253, %v267, %v265
    %vm270 = vcmp.gt.f32.partialorder %v268, 0.1
    %vm271 = vcmp.gt.f32.partialorder %v269, 0.1
    %v272 = vsel %vm270, 1, 0
    %v273 = vsel %vm271, 1, 0
    %v274 = vcvt.s32.f32 %v272
    %v275 = vcvt.s32.f32 %v273
    %276 = vst [vmem:[#allocation3 + $0x10] sm:$0xff] %v274
    %277 = vst [vmem:[#allocation3 + $0x18] sm:$0xff] %v275
    %v278 = vmul.f32 %v268, 0.5
    %v279 = vmul.f32 %v269, 0.5
    %v280 = vld [vmem:[#allocation2 + $0x20] sm:$0xff]
    %v281 = vld [vmem:[#allocation2 + $0x28] sm:$0xff]
    %v282 = vadd.f32 %v278, %v280
    %v283 = vadd.f32 %v279, %v281
    %v284 = vsub.f32 %v282, 0.1
    %v285 = vsub.f32 %v283, 0.1
    %v286 = vsel %vm270, %v284, %v282
    %v287 = vsel %vm271, %v285, %v283
    %vm288 = vcmp.gt.f32.partialorder %v286, 0.1
    %vm289 = vcmp.gt.f32.partialorder %v287, 0.1
    %v290 = vsel %vm288, 1, 0
    %v291 = vsel %vm289, 1, 0
    %v292 = vcvt.s32.f32 %v290
    %v293 = vcvt.s32.f32 %v291
    %294 = vst [vmem:[#allocation3 + $0x20] sm:$0xff] %v292
    %295 = vst [vmem:[#allocation3 + $0x28] sm:$0xff] %v293
    %v296 = vmul.f32 %v286, 0.5
    %v297 = vmul.f32 %v287, 0.5
    %v298 = vld [vmem:[#allocation2 + $0x30] sm:$0xff]
    %v299 = vld [vmem:[#allocation2 + $0x38] sm:$0xff]
    %v300 = vadd.f32 %v296, %v298
    %v301 = vadd.f32 %v297, %v299
    %v302 = vsub.f32 %v300, 0.1
    %v303 = vsub.f32 %v301, 0.1
    %v304 = vsel %vm288, %v302, %v300
    %v305 = vsel %vm289, %v303, %v301
    %vm306 = vcmp.gt.f32.partialorder %v304, 0.1
    %vm307 = vcmp.gt.f32.partialorder %v305, 0.1
    %v308 = vsel %vm306, 1, 0
    %v309 = vsel %vm307, 1, 0
    %v310 = vcvt.s32.f32 %v308
    %v311 = vcvt.s32.f32 %v309
    %312 = vst [vmem:[#allocation3 + $0x30] sm:$0xff] %v310
    %313 = vst [vmem:[#allocation3 + $0x38] sm:$0xff] %v311
    %v314 = vmul.f32 %v304, 0.5
    %v315 = vmul.f32 %v305, 0.5
    %v316 = vld [vmem:[#allocation2 + $0x40] sm:$0xff]
    %v317 = vld [vmem:[#allocation2 + $0x48] sm:$0xff]
    %v318 = vadd.f32 %v314, %v316
    %v319 = vadd.f32 %v315, %v317
    %v320 = vsub.f32 %v318, 0.1
    %v321 = vsub.f32 %v319, 0.1
    %v322 = vsel %vm306, %v320, %v318
    %v323 = vsel %vm307, %v321, %v319
    %vm324 = vcmp.gt.f32.partialorder %v322, 0.1
    %vm325 = vcmp.gt.f32.partialorder %v323, 0.1
    %v326 = vsel %vm324, 1, 0
    %v327 = vsel %vm325, 1, 0
    %v328 = vcvt.s32.f32 %v326
    %v329 = vcvt.s32.f32 %v327
    %330 = vst [vmem:[#allocation3 + $0x40] sm:$0xff] %v328
    %331 = vst [vmem:[#allocation3 + $0x48] sm:$0xff] %v329
    %v332 = vmul.f32 %v322, 0.5
    %v333 = vmul.f32 %v323, 0.5
    %v334 = vld [vmem:[#allocation2 + $0x50] sm:$0xff]
    %v335 = vld [vmem:[#allocation2 + $0x58] sm:$0xff]
    %v336 = vadd.f32 %v332, %v334
    %v337 = vadd.f32 %v333, %v335
    %v338 = vsub.f32 %v336, 0.1
    %v339 = vsub.f32 %v337, 0.1
    %v340 = vsel %vm324, %v338, %v336
    %v341 = vsel %vm325, %v339, %v337
    %vm342 = vcmp.gt.f32.partialorder %v340, 0.1
    %vm343 = vcmp.gt.f32.partialorder %v341, 0.1
    %v344 = vsel %vm342, 1, 0
    %v345 = vsel %vm343, 1, 0
    %v346 = vcvt.s32.f32 %v344
    %v347 = vcvt.s32.f32 %v345
    %348 = vst [vmem:[#allocation3 + $0x50] sm:$0xff] %v346
    %349 = vst [vmem:[#allocation3 + $0x58] sm:$0xff] %v347
    %v350 = vmul.f32 %v340, 0.5
    %v351 = vmul.f32 %v341, 0.5
    %v352 = vld [vmem:[#allocation2 + $0x60] sm:$0xff]
    %v353 = vld [vmem:[#allocation2 + $0x68] sm:$0xff]
    %v354 = vadd.f32 %v350, %v352
    %v355 = vadd.f32 %v351, %v353
    %v356 = vsub.f32 %v354, 0.1
    %v357 = vsub.f32 %v355, 0.1
    %v358 = vsel %vm342, %v356, %v354
    %v359 = vsel %vm343, %v357, %v355
    %vm360 = vcmp.gt.f32.partialorder %v358, 0.1
    %vm361 = vcmp.gt.f32.partialorder %v359, 0.1
    %v362 = vsel %vm360, 1, 0
    %v363 = vsel %vm361, 1, 0
    %v364 = vcvt.s32.f32 %v362
    %v365 = vcvt.s32.f32 %v363
    %366 = vst [vmem:[#allocation3 + $0x60] sm:$0xff] %v364
    %367 = vst [vmem:[#allocation3 + $0x68] sm:$0xff] %v365
    %v368 = vmul.f32 %v358, 0.5
    %v369 = vmul.f32 %v359, 0.5
    %v370 = vld [vmem:[#allocation2 + $0x70] sm:$0xff]
    %v371 = vld [vmem:[#allocation2 + $0x78] sm:$0xff]
    %v372 = vadd.f32 %v368, %v370
    %v373 = vadd.f32 %v369, %v371
    %v374 = vsub.f32 %v372, 0.1
    %v375 = vsub.f32 %v373, 0.1
    %v376 = vsel %vm360, %v374, %v372
    %v377 = vsel %vm361, %v375, %v373
    %vm378 = vcmp.gt.f32.partialorder %v376, 0.1
    %vm379 = vcmp.gt.f32.partialorder %v377, 0.1
    %v380 = vsel %vm378, 1, 0
    %v381 = vsel %vm379, 1, 0
    %v382 = vcvt.s32.f32 %v380
    %v383 = vcvt.s32.f32 %v381
    %384 = vst [vmem:[#allocation3 + $0x70] sm:$0xff] %v382
    %385 = vst [vmem:[#allocation3 + $0x78] sm:$0xff] %v383
    %v386 = vld [vmem:[#allocation3] sm:$0xff]
    %v387 = vld [vmem:[#allocation3 + $0x8] sm:$0xff]
    %v388 = vld [vmem:[#allocation3 + $0x10] sm:$0xff]
    %v389 = vld [vmem:[#allocation3 + $0x18] sm:$0xff]
    %v390 = vld [vmem:[#allocation3 + $0x20] sm:$0xff]
    %v391 = vld [vmem:[#allocation3 + $0x28] sm:$0xff]
    %v392 = vld [vmem:[#allocation3 + $0x30] sm:$0xff]
    %v393 = vld [vmem:[#allocation3 + $0x38] sm:$0xff]
    %v394 = vld [vmem:[#allocation3 + $0x40] sm:$0xff]
    %v395 = vld [vmem:[#allocation3 + $0x48] sm:$0xff]
    %v396 = vld [vmem:[#allocation3 + $0x50] sm:$0xff]
    %v397 = vld [vmem:[#allocation3 + $0x58] sm:$0xff]
    %v398 = vld [vmem:[#allocation3 + $0x60] sm:$0xff]
    %v399 = vld [vmem:[#allocation3 + $0x68] sm:$0xff]
    %v400 = vld [vmem:[#allocation3 + $0x70] sm:$0xff]
    %v401 = vld [vmem:[#allocation3 + $0x78] sm:$0xff]
    %v402 = vld [vmem:[#allocation10] sm:$0xff]
    %v403 = vld [vmem:[#allocation10 + $0x8] sm:$0xff]
    %v404 = vld [vmem:[#allocation10 + $0x10] sm:$0xff]
    %v405 = vld [vmem:[#allocation10 + $0x18] sm:$0xff]
    %v406 = vld [vmem:[#allocation10 + $0x20] sm:$0xff]
    %v407 = vld [vmem:[#allocation10 + $0x28] sm:$0xff]
    %v408 = vld [vmem:[#allocation10 + $0x30] sm:$0xff]
    %v409 = vld [vmem:[#allocation10 + $0x38] sm:$0xff]
    %v410 = vld [vmem:[#allocation10 + $0x40] sm:$0xff]
    %v411 = vld [vmem:[#allocation10 + $0x48] sm:$0xff]
    %v412 = vld [vmem:[#allocation10 + $0x50] sm:$0xff]
    %v413 = vld [vmem:[#allocation10 + $0x58] sm:$0xff]
    %v414 = vld [vmem:[#allocation10 + $0x60] sm:$0xff]
    %v415 = vld [vmem:[#allocation10 + $0x68] sm:$0xff]
    %v416 = vld [vmem:[#allocation10 + $0x70] sm:$0xff]
    %v417 = vld [vmem:[#allocation10 + $0x78] sm:$0xff]
    %v418 = vld [vmem:[#allocation10 + $0x80] sm:$0xff]
    %v419 = vld [vmem:[#allocation10 + $0x88] sm:$0xff]
    %v420 = vld [vmem:[#allocation10 + $0x90] sm:$0xff]
    %v421 = vld [vmem:[#allocation10 + $0x98] sm:$0xff]
    %v422 = vld [vmem:[#allocation10 + $0xa0] sm:$0xff]
    %v423 = vld [vmem:[#allocation10 + $0xa8] sm:$0xff]
    %v424 = vld [vmem:[#allocation10 + $0xb0] sm:$0xff]
    %v425 = vld [vmem:[#allocation10 + $0xb8] sm:$0xff]
    %v426 = vld [vmem:[#allocation10 + $0xc0] sm:$0xff]
    %v427 = vld [vmem:[#allocation10 + $0xc8] sm:$0xff]
    %v428 = vld [vmem:[#allocation10 + $0xd0] sm:$0xff]
    %v429 = vld [vmem:[#allocation10 + $0xd8] sm:$0xff]
    %v430 = vld [vmem:[#allocation10 + $0xe0] sm:$0xff]
    %v431 = vld [vmem:[#allocation10 + $0xe8] sm:$0xff]
    %v432 = vld [vmem:[#allocation10 + $0xf0] sm:$0xff]
    %v433 = vld [vmem:[#allocation10 + $0xf8] sm:$0xff]
    %v434 = vld [vmem:[%s4] sm:$0x1]
    %v436 = vlaneseq
    %v437 = vshrl.u32 %v436, 7
    %v438 = vsub.s32 0, %v437
    %v439 = vrot.slane %v434, %v438
    %441 = vmatprep.subr.mxu0 0.0
    %442 = vmatpush1.msra.mxu0 %v417
    %443 = vmatprep.subr.mxu0 0.0
    %444 = vmatpush1.msra.mxu0 %v416
    %445 = vmatprep.subr.mxu0 0.0
    %446 = vmatpush1.msra.mxu0 %v415
    %447 = vmatprep.subr.mxu0 0.0
    %448 = vmatpush1.msra.mxu0 %v414
    %449 = vmatprep.subr.mxu0 0.0
    %450 = vmatpush1.msra.mxu0 %v413
    %451 = vmatprep.subr.mxu0 0.0
    %452 = vmatpush1.msra.mxu0 %v412
    %453 = vmatprep.subr.mxu0 0.0
    %454 = vmatpush1.msra.mxu0 %v411
    %455 = vmatprep.subr.mxu0 0.0
    %456 = vmatpush1.msra.mxu0 %v410
    %457 = vmatprep.subr.mxu0 0.0
    %458 = vmatpush1.msra.mxu0 %v409
    %459 = vmatprep.subr.mxu0 0.0
    %460 = vmatpush1.msra.mxu0 %v408
    %461 = vmatprep.subr.mxu0 0.0
    %462 = vmatpush1.msra.mxu0 %v407
    %463 = vmatprep.subr.mxu0 0.0
    %464 = vmatpush1.msra.mxu0 %v406
    %465 = vmatprep.subr.mxu0 0.0
    %466 = vmatpush1.msra.mxu0 %v405
    %467 = vmatprep.subr.mxu0 0.0
    %468 = vmatpush1.msra.mxu0 %v404
    %469 = vmatprep.subr.mxu0 0.0
    %470 = vmatpush1.msra.mxu0 %v403
    %471 = vmatprep.subr.mxu0 0.0
    %472 = vmatpush1.msra.mxu0 %v402
    %473 = vmatprep.subr.mxu0 0.0
    %474 = vmatpush2.msra.mxu0 %v433
    %475 = vmatprep.subr.mxu0 0.0
    %476 = vmatpush2.msra.mxu0 %v432
    %477 = vmatprep.subr.mxu0 0.0
    %478 = vmatpush2.msra.mxu0 %v431
    %479 = vmatprep.subr.mxu0 0.0
    %480 = vmatpush2.msra.mxu0 %v430
    %481 = vmatprep.subr.mxu0 0.0
    %482 = vmatpush2.msra.mxu0 %v429
    %483 = vmatprep.subr.mxu0 0.0
    %484 = vmatpush2.msra.mxu0 %v428
    %485 = vmatprep.subr.mxu0 0.0
    %486 = vmatpush2.msra.mxu0 %v427
    %487 = vmatprep.subr.mxu0 0.0
    %488 = vmatpush2.msra.mxu0 %v426
    %489 = vmatprep.subr.mxu0 0.0
    %490 = vmatpush2.msra.mxu0 %v425
    %491 = vmatprep.subr.mxu0 0.0
    %492 = vmatpush2.msra.mxu0 %v424
    %493 = vmatprep.subr.mxu0 0.0
    %494 = vmatpush2.msra.mxu0 %v423
    %495 = vmatprep.subr.mxu0 0.0
    %496 = vmatpush2.msra.mxu0 %v422
    %497 = vmatprep.subr.mxu0 0.0
    %498 = vmatpush2.msra.mxu0 %v421
    %499 = vmatprep.subr.mxu0 0.0
    %500 = vmatpush2.msra.mxu0 %v420
    %501 = vmatprep.subr.mxu0 0.0
    %502 = vmatpush2.msra.mxu0 %v419
    %503 = vmatprep.subr.mxu0 0.0
    %504 = vmatpush2.msra.mxu0 %v418
    %505 = vmatprep.mubr.f32.mxu0 %v387
    %506 = vmatmul.mubr.f32.gmra.mxu0 %v386
    %v507 = vpop.f32.mrf.mxu0
    %v508 = vadd.f32 %v439, %v507
    %v509 = vpop.f32.mrf.mxu0
    %510 = vmatprep.mubr.f32.mxu0 %v389
    %511 = vmatmul.mubr.f32.gmra.mxu0 %v388
    %v512 = vpop.f32.mrf.mxu0
    %v513 = vadd.f32 %v439, %v512
    %v514 = vpop.f32.mrf.mxu0
    %515 = vmatprep.mubr.f32.mxu0 %v391
    %516 = vmatmul.mubr.f32.gmra.mxu0 %v390
    %v517 = vpop.f32.mrf.mxu0
    %v518 = vadd.f32 %v439, %v517
    %v519 = vpop.f32.mrf.mxu0
    %520 = vmatprep.mubr.f32.mxu0 %v393
    %521 = vmatmul.mubr.f32.gmra.mxu0 %v392
    %v522 = vpop.f32.mrf.mxu0
    %v523 = vadd.f32 %v439, %v522
    %v524 = vpop.f32.mrf.mxu0
    %525 = vmatprep.mubr.f32.mxu0 %v395
    %526 = vmatmul.mubr.f32.gmra.mxu0 %v394
    %v527 = vpop.f32.mrf.mxu0
    %v528 = vadd.f32 %v439, %v527
    %v529 = vpop.f32.mrf.mxu0
    %530 = vmatprep.mubr.f32.mxu0 %v397
    %531 = vmatmul.mubr.f32.gmra.mxu0 %v396
    %v532 = vpop.f32.mrf.mxu0
    %v533 = vadd.f32 %v439, %v532
    %v534 = vpop.f32.mrf.mxu0
    %535 = vmatprep.mubr.f32.mxu0 %v399
    %536 = vmatmul.mubr.f32.gmra.mxu0 %v398
    %v537 = vpop.f32.mrf.mxu0
    %v538 = vadd.f32 %v439, %v537
    %v539 = vpop.f32.mrf.mxu0
    %540 = vmatprep.mubr.f32.mxu0 %v401
    %541 = vmatmul.mubr.f32.gmra.mxu0 %v400
    %v542 = vpop.f32.mrf.mxu0
    %v543 = vadd.f32 %v439, %v542
    %v544 = vpop.f32.mrf.mxu0
    %545 = vdwg.mxu0
    %546 = vst [vmem:[#allocation4] sm:$0xff] %v508
    %547 = vst [vmem:[#allocation4 + $0x8] sm:$0xff] %v513
    %548 = vst [vmem:[#allocation4 + $0x10] sm:$0xff] %v518
    %549 = vst [vmem:[#allocation4 + $0x18] sm:$0xff] %v523
    %550 = vst [vmem:[#allocation4 + $0x20] sm:$0xff] %v528
    %551 = vst [vmem:[#allocation4 + $0x28] sm:$0xff] %v533
    %552 = vst [vmem:[#allocation4 + $0x30] sm:$0xff] %v538
    %553 = vst [vmem:[#allocation4 + $0x38] sm:$0xff] %v543
    %v554 = vld [vmem:[#allocation4] sm:$0xff]
    %v555 = vadd.f32 %v554, 0.0
    %v556 = vsub.f32 %v555, 0.1
    %v557 = vsel %vm247, %v556, %v555
    %vm558 = vcmp.gt.f32.partialorder %v557, 0.1
    %v559 = vsel %vm558, 1, 0
    %v560 = vcvt.s32.f32 %v559
    %561 = vst [vmem:[#allocation11] sm:$0xff] %v560
    %v562 = vmul.f32 %v557, 0.5
    %v563 = vld [vmem:[#allocation4 + $0x8] sm:$0xff]
    %v564 = vadd.f32 %v562, %v563
    %v565 = vsub.f32 %v564, 0.1
    %v566 = vsel %vm558, %v565, %v564
    %vm567 = vcmp.gt.f32.partialorder %v566, 0.1
    %v568 = vsel %vm567, 1, 0
    %v569 = vcvt.s32.f32 %v568
    %570 = vst [vmem:[#allocation11 + $0x8] sm:$0xff] %v569
    %v571 = vmul.f32 %v566, 0.5
    %v572 = vld [vmem:[#allocation4 + $0x10] sm:$0xff]
    %v573 = vadd.f32 %v571, %v572
    %v574 = vsub.f32 %v573, 0.1
    %v575 = vsel %vm567, %v574, %v573
    %vm576 = vcmp.gt.f32.partialorder %v575, 0.1
    %v577 = vsel %vm576, 1, 0
    %v578 = vcvt.s32.f32 %v577
    %579 = vst [vmem:[#allocation11 + $0x10] sm:$0xff] %v578
    %v580 = vmul.f32 %v575, 0.5
    %v581 = vld [vmem:[#allocation4 + $0x18] sm:$0xff]
    %v582 = vadd.f32 %v580, %v581
    %v583 = vsub.f32 %v582, 0.1
    %v584 = vsel %vm576, %v583, %v582
    %vm585 = vcmp.gt.f32.partialorder %v584, 0.1
    %v586 = vsel %vm585, 1, 0
    %v587 = vcvt.s32.f32 %v586
    %588 = vst [vmem:[#allocation11 + $0x18] sm:$0xff] %v587
    %v589 = vmul.f32 %v584, 0.5
    %v590 = vld [vmem:[#allocation4 + $0x20] sm:$0xff]
    %v591 = vadd.f32 %v589, %v590
    %v592 = vsub.f32 %v591, 0.1
    %v593 = vsel %vm585, %v592, %v591
    %vm594 = vcmp.gt.f32.partialorder %v593, 0.1
    %v595 = vsel %vm594, 1, 0
    %v596 = vcvt.s32.f32 %v595
    %597 = vst [vmem:[#allocation11 + $0x20] sm:$0xff] %v596
    %v598 = vmul.f32 %v593, 0.5
    %v599 = vld [vmem:[#allocation4 + $0x28] sm:$0xff]
    %v600 = vadd.f32 %v598, %v599
    %v601 = vsub.f32 %v600, 0.1
    %v602 = vsel %vm594, %v601, %v600
    %vm603 = vcmp.gt.f32.partialorder %v602, 0.1
    %v604 = vsel %vm603, 1, 0
    %v605 = vcvt.s32.f32 %v604
    %606 = vst [vmem:[#allocation11 + $0x28] sm:$0xff] %v605
    %v607 = vmul.f32 %v602, 0.5
    %v608 = vld [vmem:[#allocation4 + $0x30] sm:$0xff]
    %v609 = vadd.f32 %v607, %v608
    %v610 = vsub.f32 %v609, 0.1
    %v611 = vsel %vm603, %v610, %v609
    %vm612 = vcmp.gt.f32.partialorder %v611, 0.1
    %v613 = vsel %vm612, 1, 0
    %v614 = vcvt.s32.f32 %v613
    %615 = vst [vmem:[#allocation11 + $0x30] sm:$0xff] %v614
    %v616 = vmul.f32 %v611, 0.5
    %v617 = vld [vmem:[#allocation4 + $0x38] sm:$0xff]
    %v618 = vadd.f32 %v616, %v617
    %v619 = vsub.f32 %v618, 0.1
    %v620 = vsel %vm612, %v619, %v618
    %vm621 = vcmp.gt.f32.partialorder %v620, 0.1
    %v622 = vsel %vm621, 1, 0
    %v623 = vcvt.s32.f32 %v622
    %624 = vst [vmem:[#allocation11 + $0x38] sm:$0xff] %v623
    // Predicated region
    $region34: #{tpu_custom_call.1} parent=1 // pred_check
      _
    $region35: #{tpu_custom_call.1} parent=1 // pred_check_branch
      %626 = sbr.rel (0) target = $region37
    $region36: #{tpu_custom_call.1} parent=1 // pred_region
      %s628 = ssub.s32 1024, 1024
      %629 = vsyncadd [#allocation7], %s628
      %s630 = sshll.u32 [#allocation11], 4
      %s631 = int_to_ptr.vmem [resolvable:$true] %s630
      %636 = dma.vmem_to_hbm [thread:$0]  %s631, 1024, %s5, [#allocation7], 128, 128, 8
    $region37: #{tpu_custom_call.1} parent=1 // pred_fallthru
      _
    // Predicated region
    $region38: #{tpu_custom_call.1} parent=1 // pred_check
      _
    $region39: #{tpu_custom_call.1} parent=1 // pred_check_branch
      %638 = sbr.rel (0) target = $region41
    $region40: #{tpu_custom_call.1} parent=1 // pred_region
      %639 = dma.done [#allocation7], 1024
    $region41: #{tpu_custom_call.1} parent=1 // pred_fallthru
      _
    %640 = vsyncpa [#allocation6], 1
    %641 = vsyncpa [#allocation9], 1
    %642 = vsyncpa [#allocation7], 1

</llo_original>
